<compile_context>
chip_gen: v7x
topology: tpu7x:2x2x1
jax: 0.10.0
libtpu: 0.0.40
codegen_flags: <defaults>
</compile_context>

<pallas_src>
import functools

import jax
import jax.numpy as jnp
from jax.experimental import pallas as pl
from jax.experimental.pallas import tpu as pltpu


def _round_up(v, m):
    return ((v + m - 1) // m) * m


def _mlp_kernel(x_ref, w_ref, b_ref, o_ref, *, pack, d):
    # x_ref: (TM2, pack*d) f32 VMEM  -- lane-dense block of packed rows
    # w_ref: (1, pack*d)   f32 VMEM  -- W tiled `pack` times, resident
    # b_ref: (1, 1)        f32 SMEM  -- scalar bias
    # o_ref: (TM2, pack)   f32 VMEM  -- `pack` per-row results per packed row
    xw = x_ref[...] * w_ref[...]                       # dense VPU multiply
    b = b_ref[0, 0]
    # Segmented per-row reduce: original row j of a packed row lives in lanes
    # [j*d, (j+1)*d).  Static contiguous lane slices + XLU lane reductions.
    cols = [
        jnp.sum(xw[:, j * d:(j + 1) * d], axis=-1, keepdims=True)
        for j in range(pack)
    ]
    z = cols[0] if pack == 1 else jnp.concatenate(cols, axis=-1)  # (TM2, pack)
    # sigmoid(z) == 0.5*(tanh(z/2)+1): one EUP push per vreg, stable for all z.
    o_ref[...] = (0.5 * (jnp.tanh(0.5 * (z + b)) + 1.0)).astype(o_ref.dtype)
    # TODO(synk): a fully lane-dense (1, TM2*pack) output would need a
    # column->row relayout (XLU transpose) of the reduce result; left out since
    # output bytes are 1/D of input bytes and the relayout is not free.


def mlp_forward(x, w, b, *, target_bytes_per_step=2 << 20, min_rows_for_kernel=2048):
    """squeeze(sigmoid(x @ w.T + b)).  x: (N, D) f32, w: (1, D) f32, b: (1,) f32."""
    n, d = x.shape
    x = x.astype(jnp.float32)
    w_row = w.reshape(1, d).astype(jnp.float32)
    b_val = b.reshape(()).astype(jnp.float32)

    def _jnp_path(rows):
        # Exact f32 VPU math (no MXU default-precision rounding), matches kernel.
        z = jnp.sum(rows * w_row, axis=-1, keepdims=True) + b_val
        return jax.nn.sigmoid(z)                                   # (r, 1)

    # Small-batch fast path: pallas_call launch + pipeline prologue dominate,
    # and XLA fusion wins at these sizes.
    if n < max(min_rows_for_kernel, 1):
        return jnp.squeeze(_jnp_path(x))

    # ---- lane densification: pack `pack` consecutive rows into 128 lanes ----
    pack = 128 // d if (d <= 128 and 128 % d == 0) else 1
    n2 = n // pack                       # packed rows handled by the kernel
    n_tail = n - n2 * pack               # < pack leftover rows -> jnp path
    if n2 == 0:
        return jnp.squeeze(_jnp_path(x))

    pd = pack * d
    x2 = x[: n2 * pack].reshape(n2, pd)                 # free (row-major contiguous)
    w2 = jnp.tile(w_row, (1, pack)) if pack > 1 else w_row
    b2 = b_val.reshape(1, 1)

    # ---- row tile (packed rows per grid step) ----
    row_bytes = pd * 4                                   # real HBM bytes per packed row
    tm2 = max(1, target_bytes_per_step // row_bytes)     # ~2 MiB of x per step
    # v7x: keep >= ~8 blocks so both TensorCores get several pipelined steps.
    tm2 = min(tm2, _round_up(pl.cdiv(n2, 8), 8))
    # v5e: 16 MiB scoped-VMEM default; count lane padding to 128 for the x and
    # output blocks, double-buffered -> keep total under ~12 MiB.
    padded_row_bytes = (_round_up(pd, 128) + 128) * 4
    tm2 = min(tm2, (12 << 20) // (2 * padded_row_bytes))
    tm2 = max(8, (tm2 // 8) * 8)

    grid = (pl.cdiv(n2, tm2),)           # ragged last block; no jnp.pad of x
    kernel = functools.partial(_mlp_kernel, pack=pack, d=d)

    out2 = pl.pallas_call(
        kernel,
        out_shape=jax.ShapeDtypeStruct((n2, pack), jnp.float32),
        grid=grid,
        in_specs=[
            pl.BlockSpec((tm2, pd), lambda i: (i, 0)),    # x rows, pipelined
            pl.BlockSpec((1, pd), lambda i: (0, 0)),      # tiled W, resident
            pl.BlockSpec(memory_space=pltpu.SMEM),        # bias scalar in SMEM
        ],
        out_specs=pl.BlockSpec((tm2, pack), lambda i: (i, 0)),
        compiler_params=pltpu.CompilerParams(
            dimension_semantics=("parallel",),            # 2 TCs on v7x split the rows
        ),
    )(x2, w2, b2)

    out = out2.reshape(n2 * pack)
    if n_tail:
        out = jnp.concatenate([out, _jnp_path(x[n2 * pack:]).reshape(n_tail)])
    # torch.squeeze semantics on the (N, 1) linear output.
    # TODO(synk): optional bf16 input cast would halve HBM traffic if the
    # caller tolerates bf16 activations; kept f32 to preserve exact semantics.
    return jnp.squeeze(out.reshape(n, 1))


if __name__ == "__main__":
    key = jax.random.PRNGKey(0)
    k_x, k_w, k_b, k_x2, k_x3 = jax.random.split(key, 5)

    N, D = 8, 32  # batch=8, input_size=32

    x = jax.random.normal(k_x, (N, D), dtype=jnp.float32)
    bound = 1.0 / jnp.sqrt(jnp.float32(D))
    w = jax.random.uniform(k_w, (1, D), dtype=jnp.float32, minval=-bound, maxval=bound)
    b = jax.random.uniform(k_b, (1,), dtype=jnp.float32, minval=-bound, maxval=bound)

    def ref(xa):
        # Exact f32 reference (avoids MXU default-precision in `@` on TPU).
        z = jnp.sum(xa * w.reshape(1, D), axis=-1) + b[0]
        return jax.nn.sigmoid(z)

    # 1) Small case, forced through the Pallas kernel path.
    y = mlp_forward(x, w, b, min_rows_for_kernel=0)
    jax.block_until_ready(y)
    assert y.shape == (N,)
    assert jnp.allclose(y, ref(x), atol=1e-5), "mismatch vs reference (small case)"

    # 2) Ragged grid (packed rows not divisible by the tile), still the kernel.
    N2 = 300
    x2 = jax.random.normal(k_x2, (N2, D), dtype=jnp.float32)
    y2 = mlp_forward(x2, w, b, min_rows_for_kernel=0)
    jax.block_until_ready(y2)
    assert y2.shape == (N2,)
    assert jnp.allclose(y2, ref(x2), atol=1e-5), "mismatch vs reference (ragged case)"

    # 3) Default path: exercises row-packing remainder (5003 % 4 == 3),
    #    the ragged last block, and the >=8-block tile cap.
    N3 = 5003
    x3 = jax.random.normal(k_x3, (N3, D), dtype=jnp.float32)
    y3 = mlp_forward(x3, w, b)
    jax.block_until_ready(y3)
    assert y3.shape == (N3,)
    assert jnp.allclose(y3, ref(x3), atol=1e-5), "mismatch vs reference (large case)"

    print("KERNEL_OK")
</pallas_src>

<mosaic_0001>
module attributes {stable_mosaic.version = 11 : i64} {
  func.func @_mlp_kernel(%arg0: i32, %arg1: memref<8x128xf32, #tpu.memory_space<vmem>>, %arg2: memref<1x128xf32, #tpu.memory_space<vmem>>, %arg3: memref<1x1xf32, #tpu.memory_space<smem>>, %arg4: memref<8x4xf32, #tpu.memory_space<vmem>>) attributes {dimension_semantics = [#tpu.dimension_semantics<parallel>], iteration_bounds = array<i64: 1>, scalar_prefetch = 0 : i64, scratch_operands = 0 : i64, tpu.core_type = #tpu.core_type<tc>, window_params = [{transform_indices = @transform_0, window_bounds = array<i64: 8, 128>}, {pipeline_mode = #tpu.pipeline_mode<synchronous>, transform_indices = @transform_1, window_bounds = array<i64: 1, 128>}, {transform_indices = @transform_2, window_bounds = array<i64: 1, 1>}, {transform_indices = @transform_3, window_bounds = array<i64: 8, 4>}]} {
    %c0 = arith.constant 0 : index
    %c0_0 = arith.constant 0 : index
    %0 = vector.load %arg1[%c0, %c0_0] : memref<8x128xf32, #tpu.memory_space<vmem>>, vector<8x128xf32>
    %c0_1 = arith.constant 0 : index
    %c0_2 = arith.constant 0 : index
    %1 = vector.load %arg2[%c0_1, %c0_2] : memref<1x128xf32, #tpu.memory_space<vmem>>, vector<1x128xf32>
    %2 = vector.broadcast %1 : vector<1x128xf32> to vector<8x128xf32>
    %3 = arith.mulf %0, %2 : vector<8x128xf32>
    %c0_3 = arith.constant 0 : index
    %c0_4 = arith.constant 0 : index
    %4 = memref.load %arg3[%c0_3, %c0_4] : memref<1x1xf32, #tpu.memory_space<smem>>
    %5 = vector.extract_strided_slice %3 {offsets = [0, 0], sizes = [8, 32], strides = [1, 1]} : vector<8x128xf32> to vector<8x32xf32>
    %cst = arith.constant dense<0.000000e+00> : vector<8xf32>
    %6 = vector.multi_reduction <add>, %5, %cst [1] : vector<8x32xf32> to vector<8xf32>
    %7 = vector.shape_cast %6 : vector<8xf32> to vector<8x1xf32>
    %8 = vector.extract_strided_slice %3 {offsets = [0, 32], sizes = [8, 32], strides = [1, 1]} : vector<8x128xf32> to vector<8x32xf32>
    %cst_5 = arith.constant dense<0.000000e+00> : vector<8xf32>
    %9 = vector.multi_reduction <add>, %8, %cst_5 [1] : vector<8x32xf32> to vector<8xf32>
    %10 = vector.shape_cast %9 : vector<8xf32> to vector<8x1xf32>
    %11 = vector.extract_strided_slice %3 {offsets = [0, 64], sizes = [8, 32], strides = [1, 1]} : vector<8x128xf32> to vector<8x32xf32>
    %cst_6 = arith.constant dense<0.000000e+00> : vector<8xf32>
    %12 = vector.multi_reduction <add>, %11, %cst_6 [1] : vector<8x32xf32> to vector<8xf32>
    %13 = vector.shape_cast %12 : vector<8xf32> to vector<8x1xf32>
    %14 = vector.extract_strided_slice %3 {offsets = [0, 96], sizes = [8, 32], strides = [1, 1]} : vector<8x128xf32> to vector<8x32xf32>
    %cst_7 = arith.constant dense<0.000000e+00> : vector<8xf32>
    %15 = vector.multi_reduction <add>, %14, %cst_7 [1] : vector<8x32xf32> to vector<8xf32>
    %16 = vector.shape_cast %15 : vector<8xf32> to vector<8x1xf32>
    %17 = tpu.concatenate %7, %10, %13, %16 in 1 : vector<8x1xf32>, vector<8x1xf32>, vector<8x1xf32>, vector<8x1xf32> -> vector<8x4xf32>
    %18 = vector.broadcast %4 : f32 to vector<8x4xf32>
    %19 = arith.addf %17, %18 : vector<8x4xf32>
    %cst_8 = arith.constant 5.000000e-01 : f32
    %20 = vector.broadcast %cst_8 : f32 to vector<8x4xf32>
    %21 = arith.mulf %20, %19 : vector<8x4xf32>
    %22 = math.tanh %21 : vector<8x4xf32>
    %cst_9 = arith.constant 1.000000e+00 : f32
    %23 = vector.broadcast %cst_9 : f32 to vector<8x4xf32>
    %24 = arith.addf %22, %23 : vector<8x4xf32>
    %cst_10 = arith.constant 5.000000e-01 : f32
    %25 = vector.broadcast %cst_10 : f32 to vector<8x4xf32>
    %26 = arith.mulf %25, %24 : vector<8x4xf32>
    %c0_11 = arith.constant 0 : index
    %c0_12 = arith.constant 0 : index
    %27 = vector.load %arg4[%c0_11, %c0_12] : memref<8x4xf32, #tpu.memory_space<vmem>>, vector<8x4xf32>
    tpu.vector_store %arg4[%c0_11, %c0_12], %26 {strides = array<i32>} : memref<8x4xf32, #tpu.memory_space<vmem>>, vector<8x4xf32>,
    return
  }
  func.func @transform_0(%arg0: i32) -> (i32, i32) {
    %c0_i32 = arith.constant 0 : i32
    %c0_i32_0 = arith.constant 0 : i32
    return %arg0, %c0_i32 : i32, i32
  }
  func.func @transform_1(%arg0: i32) -> (i32, i32) {
    %c0_i32 = arith.constant 0 : i32
    %c0_i32_0 = arith.constant 0 : i32
    %c0_i32_1 = arith.constant 0 : i32
    return %c0_i32, %c0_i32_0 : i32, i32
  }
  func.func @transform_2(%arg0: i32) -> (i32, i32) {
    %c0_i32 = arith.constant 0 : i32
    %c0_i32_0 = arith.constant 0 : i32
    %c0_i32_1 = arith.constant 0 : i32
    return %c0_i32, %c0_i32_0 : i32, i32
  }
  func.func @transform_3(%arg0: i32) -> (i32, i32) {
    %c0_i32 = arith.constant 0 : i32
    %c0_i32_0 = arith.constant 0 : i32
    return %arg0, %c0_i32 : i32, i32
  }
}

</mosaic_0001>

<llo_original>
// kernel: tpu_custom_call.1
$region0: #{tpu_custom_call.1}
  #allocation0 [shape = 'u32[]', space=smem, size = 0x4, offset = 0x4, fixed_abs, tag = 'smem constant byte address 0x4 - core index']
  #allocation1 [shape = 'u32[144,128]{1,0:T(1,128)}', space=vmem, size = 0x12000, scoped, tag = 'internal scratch']
  #allocation2 [shape = 'f32[1,1]{1,0:T(1,128)S(6)}', space=smem, size = 0x200, scoped, tag = 'scoped memory for tpu_custom_call.1']
  %s0 = inlined_call_operand.vmem [shape: f32[2,128], index: 0, kind: input, shape index: {}]
  %s1 = inlined_call_operand.vmem [shape: f32[1,128], index: 1, kind: input, shape index: {}]
  %s2 = inlined_call_operand.<no memory space> [shape: f32[1,1], index: 2, kind: input, shape index: {}]
  %s3 = inlined_call_operand.hbm [shape: f32[2,4], index: 3, kind: output, shape index: {}]
  %s4 = sld [smem:[#allocation0]]
  $region22: #{tpu_custom_call.1} parent=0
    _
  %s6 = ssub.s32 1, %s4
  %s7 = scalar_select 0, %s6, %s4
  %8 = sst [smem:[#allocation2]] %s2
  $region1: #{tpu_custom_call.1} parent=0
    #allocation3 [shape = 'u8[4096]{0}', space=vmem, size = 0x1000, scoped, tag = 'output window, operand 0, single buffered']
    #allocation4 [shape = 's32[1]{0}', space=sflag, size = 0x4, scoped, tag = 'scoped memory for tpu_custom_call.1']
    %9 = vsyncpa [#allocation4], 0
    // Predicated region
    $region2: #{tpu_custom_call.1} parent=1 // pred_check
      _
    $region3: #{tpu_custom_call.1} parent=1 // pred_check_branch
      %11 = sbr.rel (0) target = $region5
    $region4: #{tpu_custom_call.1} parent=1 // pred_region
      _
    $region5: #{tpu_custom_call.1} parent=1 // pred_fallthru
      _
    // Predicated region
    $region6: #{tpu_custom_call.1} parent=1 // pred_check
      _
    $region7: #{tpu_custom_call.1} parent=1 // pred_check_branch
      %13 = sbr.rel (0) target = $region9
    $region8: #{tpu_custom_call.1} parent=1 // pred_region
      _
    $region9: #{tpu_custom_call.1} parent=1 // pred_fallthru
      _
    // Predicated region
    $region10: #{tpu_custom_call.1} parent=1 // pred_check
      _
    $region11: #{tpu_custom_call.1} parent=1 // pred_check_branch
      %15 = sbr.rel (0) target = $region13
    $region12: #{tpu_custom_call.1} parent=1 // pred_region
      _
    $region13: #{tpu_custom_call.1} parent=1 // pred_fallthru
      _
    %v16 = vld [vmem:[%s0] sm:$0xff]
    %v17 = vld [vmem:[%s1] sm:$0x1]
    %v19 = vlaneseq
    %v20 = vshrl.u32 %v19, 7
    %v21 = vsub.s32 0, %v20
    %v22 = vrot.slane %v17, %v21
    %v24 = vmul.f32 %v16, %v22
    %s25 = sld [smem:[#allocation2]]
    %vm26 = vcmask 261120
    %v27 = vsel %vm26, %v24, 0.0
    %28 = vadd.xlane.f32.xlu0 %v27
    %v29 = vpop.xlane.xlu0 %28
    %31 = vrot.lane.b32.xlu0 %v24, 96
    %v32 = vpop.permute.xlu0 %31
    %v34 = vsel %vm26, %v32, 0.0
    %35 = vadd.xlane.f32.xlu0 %v34
    %v36 = vpop.xlane.xlu0 %35
    %37 = vrot.lane.b32.xlu0 %v24, 64
    %v38 = vpop.permute.xlu0 %37
    %v40 = vsel %vm26, %v38, 0.0
    %41 = vadd.xlane.f32.xlu0 %v40
    %v42 = vpop.xlane.xlu0 %41
    %43 = vrot.lane.b32.xlu0 %v24, 32
    %v44 = vpop.permute.xlu0 %43
    %v46 = vsel %vm26, %v44, 0.0
    %47 = vadd.xlane.f32.xlu0 %v46
    %v48 = vpop.xlane.xlu0 %47
    %vm49 = vcmask 7168
    %v50 = vsel %vm49, %v29, %v36
    %vm51 = vcmask 15360
    %v52 = vsel %vm51, %v50, %v42
    %vm53 = vcmask 23552
    %v54 = vsel %vm53, %v52, %v48
    %v55 = vstv %s25
    %v56 = vadd.f32 %v54, %v55
    %v57 = vmul.f32 %v56, 0.5
    %v58 = vtanh.pop %v57
    %v59 = vadd.f32 %v58, 1.0
    %v60 = vmul.f32 %v59, 0.5
    %vm61 = vcmask 31744
    %62 = vst.msk [vmem:[#allocation3] sm:$0xff] %vm61, %v60
    // Predicated region
    $region14: #{tpu_custom_call.1} parent=1 // pred_check
      _
    $region15: #{tpu_custom_call.1} parent=1 // pred_check_branch
      %64 = sbr.rel (0) target = $region17
    $region16: #{tpu_custom_call.1} parent=1 // pred_region
      %s66 = ssub.s32 128, 32
      %67 = vsyncadd [#allocation4], %s66
      %s68 = sshll.u32 [#allocation3], 4
      %s69 = int_to_ptr.vmem [resolvable:$true] %s68
      %74 = dma.vmem_to_hbm [thread:$0]  %s69, 32, %s3, [#allocation4], 32, 32, 2
    $region17: #{tpu_custom_call.1} parent=1 // pred_fallthru
      _
    // Predicated region
    $region18: #{tpu_custom_call.1} parent=1 // pred_check
      _
    $region19: #{tpu_custom_call.1} parent=1 // pred_check_branch
      %76 = sbr.rel (0) target = $region21
    $region20: #{tpu_custom_call.1} parent=1 // pred_region
      %77 = dma.done [#allocation4], 128
    $region21: #{tpu_custom_call.1} parent=1 // pred_fallthru
      _
    %78 = vsyncpa [#allocation4], 1

</llo_original>
